<compile_context>
chip_gen: v7x
topology: tpu7x:2x2x1
jax: 0.10.0
libtpu: 0.0.40
codegen_flags: <defaults>
</compile_context>

<pallas_src>
import jax
import jax.numpy as jnp
from jax.experimental import pallas as pl
from jax.experimental.pallas import tpu as pltpu


def _make_kernel(H, W, C, KH, KW):
    WC = W * C

    def kernel(x_ref, m_ref, b_ref, alpha_ref, o_ref, xpad_ref):
        # x_ref:     (1, H, W*C)       input tile, channels-last rows (lane-dense)
        # m_ref:     (KH, (W+2)*C, W*C) banded per-kernel-row weight matrices
        # b_ref:     (1, W*C)          bias tiled along W
        # alpha_ref: (1,)   SMEM       ReZero scalar
        # o_ref:     (1, H, W*C)       output tile
        # xpad_ref:  (H+2, (W+2)*C)    VMEM scratch: zero-padded working tile

        # Build the padded tile in VMEM from the single HBM read of x.
        xpad_ref[...] = jnp.zeros_like(xpad_ref)
        x = x_ref[0]                                   # (H, W*C)
        xpad_ref[1:H + 1, C:C + WC] = x

        # 3x3 "same" conv == sum over kernel rows of one banded matmul each.
        acc = jnp.broadcast_to(b_ref[...], (H, WC)).astype(jnp.float32)
        for kh in range(KH):
            acc = acc + jnp.dot(xpad_ref[kh:kh + H, :], m_ref[kh],
                                preferred_element_type=jnp.float32)

        f = jnp.maximum(acc, 0.0)                      # relu
        alpha = alpha_ref[0]                           # SMEM scalar
        o_ref[0] = (x + alpha * f).astype(o_ref.dtype)

    return kernel


def conv2d_rz(x_nchw, w_pt, bias, alpha):
    """x_nchw: (N, C, H, W); w_pt: (Cout=C, Cin=C, KH, KW); bias: (C,); alpha: scalar."""
    N, C, H, W = x_nchw.shape
    Cout, Cin, KH, KW = w_pt.shape
    assert Cout == C and Cin == C and KH == 3 and KW == 3

    # TODO(synk): the NCHW<->NHWC transposes below are extra HBM passes forced
    # by the PyTorch layout; an NHWC end-to-end model would drop them entirely.
    x = jnp.transpose(x_nchw, (0, 2, 3, 1)).astype(jnp.float32)     # (N, H, W, C)
    x2 = x.reshape(N, H, W * C)                                     # free reshape

    Wp = W + KW - 1
    # Banded weight matrices so that conv(x)[h, w, co] =
    #   sum_kh ( xpad_row[h+kh, :] @ M[kh] )[w*C + co]
    # with M[kh][(w+kw)*C + ci, w*C + co] = w_pt[co, ci, kh, kw].
    w_hw = jnp.transpose(w_pt.astype(jnp.float32), (2, 3, 1, 0))    # (KH, KW, Cin, Cout)
    wo = jnp.arange(W)
    Mb = jnp.zeros((KH, Wp, W, C, C), jnp.float32)
    for kh in range(KH):
        for kw in range(KW):
            Mb = Mb.at[kh, wo + kw, wo].set(w_hw[kh, kw])
    m_mat = jnp.transpose(Mb, (0, 1, 3, 2, 4)).reshape(KH, Wp * C, W * C)

    b_row = jnp.tile(bias.astype(jnp.float32), (W,)).reshape(1, W * C)
    a_s = jnp.asarray(alpha, jnp.float32).reshape(1)

    kernel = _make_kernel(H, W, C, KH, KW)
    out2 = pl.pallas_call(
        kernel,
        out_shape=jax.ShapeDtypeStruct((N, H, W * C), jnp.float32),
        grid_spec=pltpu.PrefetchScalarGridSpec(
            num_scalar_prefetch=0,
            grid=(N,),
            in_specs=[
                pl.BlockSpec((1, H, W * C), lambda n: (n, 0, 0)),
                pl.BlockSpec((KH, Wp * C, W * C), lambda n: (0, 0, 0)),
                pl.BlockSpec((1, W * C), lambda n: (0, 0)),
                pl.BlockSpec(memory_space=pltpu.MemorySpace.SMEM),
            ],
            out_specs=pl.BlockSpec((1, H, W * C), lambda n: (n, 0, 0)),
            scratch_shapes=[
                pltpu.VMEM((H + KH - 1, Wp * C), jnp.float32),
            ],
        ),
        compiler_params=pltpu.CompilerParams(
            dimension_semantics=("parallel",)),
    )(x2, m_mat, b_row, a_s)

    out_nhwc = out2.reshape(N, H, W, C)                 # free reshape back
    return jnp.transpose(out_nhwc, (0, 3, 1, 2))        # back to NCHW


def _reference(x_nchw, w_pt, bias, alpha):
    # pure-JAX reference (NHWC conv via lax) for correctness checking
    x = jnp.transpose(x_nchw, (0, 2, 3, 1))
    w = jnp.transpose(w_pt, (2, 3, 1, 0))               # HWIO
    f = jax.lax.conv_general_dilated(
        x, w, window_strides=(1, 1), padding=((1, 1), (1, 1)),
        dimension_numbers=("NHWC", "HWIO", "NHWC"))
    f = f + bias.reshape(1, 1, 1, -1)
    out = x + alpha * jnp.maximum(f, 0.0)
    return jnp.transpose(out, (0, 3, 1, 2))


if __name__ == "__main__":
    key = jax.random.PRNGKey(0)
    k_x, k_w, k_b = jax.random.split(key, 3)

    N, C, H, W = 2, 4, 16, 16
    KH = KW = 3

    x = jax.random.normal(k_x, (N, C, H, W), jnp.float32)
    # deterministic parameter init (shapes per nn.Conv2d(C, C, 3, bias=True))
    fan_in = C * KH * KW
    bound = 1.0 / (fan_in ** 0.5)
    w_pt = jax.random.uniform(k_w, (C, C, KH, KW), jnp.float32, -bound, bound)
    bias = jax.random.uniform(k_b, (C,), jnp.float32, -bound, bound)
    alpha_init = jnp.float32(0.0)      # nn.Parameter(torch.Tensor([0])) in __init__

    # run with the true init value (alpha = 0 -> output == x)
    out0 = jax.block_until_ready(conv2d_rz(x, w_pt, bias, alpha_init))
    ref0 = _reference(x, w_pt, bias, alpha_init)
    assert jnp.allclose(out0, ref0, atol=1e-5, rtol=1e-5)

    # also exercise a non-trivial alpha to validate the conv/relu path
    alpha_nz = jnp.float32(0.5)
    out1 = jax.block_until_ready(conv2d_rz(x, w_pt, bias, alpha_nz))
    ref1 = _reference(x, w_pt, bias, alpha_nz)
    assert jnp.allclose(out1, ref1, atol=1e-4, rtol=1e-4)

    print("KERNEL_OK")
</pallas_src>

<mosaic_0001>
module attributes {stable_mosaic.version = 11 : i64} {
  func.func @kernel(%arg0: i32, %arg1: memref<1x16x64xf32, #tpu.memory_space<vmem>>, %arg2: memref<3x72x64xf32, #tpu.memory_space<vmem>>, %arg3: memref<1x64xf32, #tpu.memory_space<vmem>>, %arg4: memref<1xf32, #tpu.memory_space<smem>>, %arg5: memref<1x16x64xf32, #tpu.memory_space<vmem>>, %arg6: memref<18x72xf32, #tpu.memory_space<vmem>>) attributes {dimension_semantics = [#tpu.dimension_semantics<parallel>], iteration_bounds = array<i64: 2>, scalar_prefetch = 0 : i64, scratch_operands = 1 : i64, tpu.core_type = #tpu.core_type<tc>, window_params = [{transform_indices = @transform_0, window_bounds = array<i64: 1, 16, 64>}, {pipeline_mode = #tpu.pipeline_mode<synchronous>, transform_indices = @transform_1, window_bounds = array<i64: 3, 72, 64>}, {pipeline_mode = #tpu.pipeline_mode<synchronous>, transform_indices = @transform_2, window_bounds = array<i64: 1, 64>}, {transform_indices = @transform_3, window_bounds = array<i64: 1>}, {transform_indices = @transform_4, window_bounds = array<i64: 1, 16, 64>}]} {
    %cst = arith.constant 0.000000e+00 : f32
    %0 = vector.broadcast %cst : f32 to vector<18x72xf32>
    %c0 = arith.constant 0 : index
    %c0_0 = arith.constant 0 : index
    %1 = vector.load %arg6[%c0, %c0_0] : memref<18x72xf32, #tpu.memory_space<vmem>>, vector<18x72xf32>
    tpu.vector_store %arg6[%c0, %c0_0], %0 {strides = array<i32>} : memref<18x72xf32, #tpu.memory_space<vmem>>, vector<18x72xf32>,
    %c0_1 = arith.constant 0 : index
    %c0_2 = arith.constant 0 : index
    %c0_3 = arith.constant 0 : index
    %2 = vector.load %arg1[%c0_1, %c0_2, %c0_3] : memref<1x16x64xf32, #tpu.memory_space<vmem>>, vector<1x16x64xf32>
    %3 = vector.shape_cast %2 : vector<1x16x64xf32> to vector<16x64xf32>
    %c1 = arith.constant 1 : index
    %c4 = arith.constant 4 : index
    %4 = vector.load %arg6[%c1, %c4] : memref<18x72xf32, #tpu.memory_space<vmem>>, vector<16x64xf32>
    tpu.vector_store %arg6[%c1, %c4], %3 {strides = array<i32>} : memref<18x72xf32, #tpu.memory_space<vmem>>, vector<16x64xf32>,
    %c0_4 = arith.constant 0 : index
    %c0_5 = arith.constant 0 : index
    %5 = vector.load %arg3[%c0_4, %c0_5] : memref<1x64xf32, #tpu.memory_space<vmem>>, vector<1x64xf32>
    %6 = vector.shape_cast %5 : vector<1x64xf32> to vector<1x64xf32>
    %7 = vector.broadcast %6 : vector<1x64xf32> to vector<16x64xf32>
    %c0_6 = arith.constant 0 : index
    %c0_7 = arith.constant 0 : index
    %8 = vector.load %arg6[%c0_6, %c0_7] : memref<18x72xf32, #tpu.memory_space<vmem>>, vector<16x72xf32>
    %c0_8 = arith.constant 0 : index
    %c0_9 = arith.constant 0 : index
    %c0_10 = arith.constant 0 : index
    %9 = vector.load %arg2[%c0_8, %c0_9, %c0_10] : memref<3x72x64xf32, #tpu.memory_space<vmem>>, vector<1x72x64xf32>
    %10 = vector.shape_cast %9 : vector<1x72x64xf32> to vector<72x64xf32>
    %cst_11 = arith.constant dense<0.000000e+00> : vector<16x64xf32>
    %11 = tpu.matmul %8, %10, %cst_11 {dimension_numbers = #tpu.dot_dimension_numbers<[1], [0], [0], [1], [0, 0, 1, 1], [], []>} : vector<16x72xf32>, vector<72x64xf32>, vector<16x64xf32> -> vector<16x64xf32>
    %12 = arith.addf %7, %11 : vector<16x64xf32>
    %c1_12 = arith.constant 1 : index
    %c0_13 = arith.constant 0 : index
    %13 = vector.load %arg6[%c1_12, %c0_13] : memref<18x72xf32, #tpu.memory_space<vmem>>, vector<16x72xf32>
    %c1_14 = arith.constant 1 : index
    %c0_15 = arith.constant 0 : index
    %c0_16 = arith.constant 0 : index
    %14 = vector.load %arg2[%c1_14, %c0_15, %c0_16] : memref<3x72x64xf32, #tpu.memory_space<vmem>>, vector<1x72x64xf32>
    %15 = vector.shape_cast %14 : vector<1x72x64xf32> to vector<72x64xf32>
    %cst_17 = arith.constant dense<0.000000e+00> : vector<16x64xf32>
    %16 = tpu.matmul %13, %15, %cst_17 {dimension_numbers = #tpu.dot_dimension_numbers<[1], [0], [0], [1], [0, 0, 1, 1], [], []>} : vector<16x72xf32>, vector<72x64xf32>, vector<16x64xf32> -> vector<16x64xf32>
    %17 = arith.addf %12, %16 : vector<16x64xf32>
    %c2 = arith.constant 2 : index
    %c0_18 = arith.constant 0 : index
    %18 = vector.load %arg6[%c2, %c0_18] : memref<18x72xf32, #tpu.memory_space<vmem>>, vector<16x72xf32>
    %c2_19 = arith.constant 2 : index
    %c0_20 = arith.constant 0 : index
    %c0_21 = arith.constant 0 : index
    %19 = vector.load %arg2[%c2_19, %c0_20, %c0_21] : memref<3x72x64xf32, #tpu.memory_space<vmem>>, vector<1x72x64xf32>
    %20 = vector.shape_cast %19 : vector<1x72x64xf32> to vector<72x64xf32>
    %cst_22 = arith.constant dense<0.000000e+00> : vector<16x64xf32>
    %21 = tpu.matmul %18, %20, %cst_22 {dimension_numbers = #tpu.dot_dimension_numbers<[1], [0], [0], [1], [0, 0, 1, 1], [], []>} : vector<16x72xf32>, vector<72x64xf32>, vector<16x64xf32> -> vector<16x64xf32>
    %22 = arith.addf %17, %21 : vector<16x64xf32>
    %cst_23 = arith.constant 0.000000e+00 : f32
    %23 = vector.broadcast %cst_23 : f32 to vector<16x64xf32>
    %24 = arith.maximumf %22, %23 : vector<16x64xf32>
    %c0_24 = arith.constant 0 : index
    %25 = memref.load %arg4[%c0_24] : memref<1xf32, #tpu.memory_space<smem>>
    %26 = vector.broadcast %25 : f32 to vector<16x64xf32>
    %27 = arith.mulf %26, %24 : vector<16x64xf32>
    %28 = arith.addf %3, %27 : vector<16x64xf32>
    %c0_25 = arith.constant 0 : index
    %c0_26 = arith.constant 0 : index
    %c0_27 = arith.constant 0 : index
    %29 = vector.load %arg5[%c0_25, %c0_26, %c0_27] : memref<1x16x64xf32, #tpu.memory_space<vmem>>, vector<1x16x64xf32>
    %30 = vector.shape_cast %29 : vector<1x16x64xf32> to vector<16x64xf32>
    %31 = vector.shape_cast %28 : vector<16x64xf32> to vector<1x16x64xf32>
    tpu.vector_store %arg5[%c0_25, %c0_26, %c0_27], %31 {strides = array<i32>} : memref<1x16x64xf32, #tpu.memory_space<vmem>>, vector<1x16x64xf32>,
    return
  }
  func.func @transform_0(%arg0: i32) -> (i32, i32, i32) {
    %c0_i32 = arith.constant 0 : i32
    %c0_i32_0 = arith.constant 0 : i32
    %c0_i32_1 = arith.constant 0 : i32
    return %arg0, %c0_i32, %c0_i32_0 : i32, i32, i32
  }
  func.func @transform_1(%arg0: i32) -> (i32, i32, i32) {
    %c0_i32 = arith.constant 0 : i32
    %c0_i32_0 = arith.constant 0 : i32
    %c0_i32_1 = arith.constant 0 : i32
    %c0_i32_2 = arith.constant 0 : i32
    return %c0_i32, %c0_i32_0, %c0_i32_1 : i32, i32, i32
  }
  func.func @transform_2(%arg0: i32) -> (i32, i32) {
    %c0_i32 = arith.constant 0 : i32
    %c0_i32_0 = arith.constant 0 : i32
    %c0_i32_1 = arith.constant 0 : i32
    return %c0_i32, %c0_i32_0 : i32, i32
  }
  func.func @transform_3(%arg0: i32) -> i32 {
    %c0_i32 = arith.constant 0 : i32
    %c0_i32_0 = arith.constant 0 : i32
    return %c0_i32 : i32
  }
  func.func @transform_4(%arg0: i32) -> (i32, i32, i32) {
    %c0_i32 = arith.constant 0 : i32
    %c0_i32_0 = arith.constant 0 : i32
    %c0_i32_1 = arith.constant 0 : i32
    return %arg0, %c0_i32, %c0_i32_0 : i32, i32, i32
  }
}

</mosaic_0001>

<llo_original>
// kernel: tpu_custom_call.1
$region0: #{tpu_custom_call.1}
  #allocation0 [shape = 'u32[]', space=smem, size = 0x4, offset = 0x4, fixed_abs, tag = 'smem constant byte address 0x4 - core index']
  #allocation1 [shape = 'u32[144,128]{1,0:T(1,128)}', space=vmem, size = 0x12000, scoped, tag = 'internal scratch']
  #allocation2 [shape = 'f32[18,72]{1,0:T(8,128)}', space=vmem, size = 0x3000, scoped, tag = 'scratch operand']
  #allocation3 [shape = 'f32[1]{0:T(128)S(6)}', space=smem, size = 0x200, scoped, tag = 'scoped memory for tpu_custom_call.1']
  %s0 = inlined_call_operand.vmem [shape: f32[2,16,64], index: 0, kind: input, shape index: {}]
  %s1 = inlined_call_operand.vmem [shape: f32[3,72,64], index: 1, kind: input, shape index: {}]
  %s2 = inlined_call_operand.vmem [shape: f32[1,64], index: 2, kind: input, shape index: {}]
  %s3 = inlined_call_operand.<no memory space> [shape: f32[1], index: 3, kind: input, shape index: {}]
  %s4 = inlined_call_operand.hbm [shape: f32[2,16,64], index: 4, kind: output, shape index: {}]
  %s5 = sld [smem:[#allocation0]]
  $region49: #{tpu_custom_call.1} parent=0
    _
  %s7 = ssub.s32 1, %s5
  %s8 = scalar_select 0, %s7, %s5
  %9 = sst [smem:[#allocation3]] %s3
  $region1: #{tpu_custom_call.1} parent=0
    #allocation4 [shape = 'u8[16384]{0}', space=vmem, size = 0x4000, scoped, tag = 'output window, operand 0']
    #allocation5 [shape = 's32[2]{0}', space=sflag, size = 0x8, scoped, tag = 'scoped memory for tpu_custom_call.1']
    %10 = vsyncpa [#allocation5], 0
    %s11 = scalar_lea.sflag [#allocation5], 1
    %12 = vsyncpa %s11, 0
    loop: start=0, step=1, limit=4
    $region2: #{tpu_custom_call.1} parent=1 // loop_pre_header
      _
    $region3: #{tpu_custom_call.1} parent=1 // loop_header
      %s14 = sphi 0, %s18
      %p15 = scmp.ge.s32.totalorder %s14, 4
      %s24 = sphi 0, %s26
      %s27 = sphi 0, %s24
      %s28 = sphi 0, %s27
      %s44 = sphi 0, %s28
      %s48 = sphi 0, %s48
      %s50 = sphi 0, %s48
      %s51 = sphi 0, %s50
      %s65 = sphi 0, %s51
      %s69 = sphi 0, %s69
      %s71 = sphi 0, %s69
      %s72 = sphi 0, %s71
      %s86 = sphi 0, %s72
      %s90 = sphi 0, %s90
      %s92 = sphi 0, %s90
      %s93 = sphi 0, %s92
      %s107 = sphi 0, %s93
      %s113 = sphi 0, %s115
      %s116 = sphi 0, %s113
      %s117 = sphi 0, %s116
      %s133 = sphi 0, %s117
    $region4: #{tpu_custom_call.1} parent=1 // loop_header_branch
      %17 = sbr.rel (%p15) target = $region8
    $region5: #{tpu_custom_call.1} parent=1 // loop_body
      %s19 = ssub.s32 %s14, 1
      %s20 = ssub.s32 %s14, 2
      %s21 = sadd.s32 %s14, 1
      %s22 = ssub.s32 %s14, %s21
      %p23 = scmp.eq.s32.totalorder %s22, 0
      %s25 = sadd.s32 %s24, 1
      %s26 = scalar_select %p23, %s24, %s25
      %p29 = pneg %p23
      %p30 = scmp.eq.s32.totalorder %s14, 1
      %p31 = por %p29, %p30
      %p32 = scmp.ne.s32.totalorder %s24, %s27
      %p33 = scmp.eq.s32.totalorder %s14, 0
      %p34 = por %p32, %p33
      %p35 = scmp.ne.s32.totalorder %s24, %s27
      %p36 = scmp.eq.s32.totalorder %s19, 1
      %p37 = por %p35, %p36
      %p38 = scmp.ne.s32.totalorder %s27, %s28
      %p39 = scmp.eq.s32.totalorder %s19, 0
      %p40 = por %p38, %p39
      %p41 = scmp.ne.s32.totalorder %s27, %s28
      %p42 = scmp.eq.s32.totalorder %s20, 1
      %p43 = por %p41, %p42
      %p45 = scmp.ne.s32.totalorder %s28, %s44
      %p46 = scmp.eq.s32.totalorder %s20, 0
      %p47 = por %p45, %p46
      %s49 = sadd.s32 %s48, 1
      %p52 = scmp.eq.s32.totalorder %s14, 1
      %p53 = scmp.ne.s32.totalorder %s48, %s50
      %p54 = scmp.eq.s32.totalorder %s14, 0
      %p55 = por %p53, %p54
      %p56 = scmp.ne.s32.totalorder %s48, %s50
      %p57 = scmp.eq.s32.totalorder %s19, 1
      %p58 = por %p56, %p57
      %p59 = scmp.ne.s32.totalorder %s50, %s51
      %p60 = scmp.eq.s32.totalorder %s19, 0
      %p61 = por %p59, %p60
      %p62 = scmp.ne.s32.totalorder %s50, %s51
      %p63 = scmp.eq.s32.totalorder %s20, 1
      %p64 = por %p62, %p63
      %p66 = scmp.ne.s32.totalorder %s51, %s65
      %p67 = scmp.eq.s32.totalorder %s20, 0
      %p68 = por %p66, %p67
      %s70 = sadd.s32 %s69, 1
      %p73 = scmp.eq.s32.totalorder %s14, 1
      %p74 = scmp.ne.s32.totalorder %s69, %s71
      %p75 = scmp.eq.s32.totalorder %s14, 0
      %p76 = por %p74, %p75
      %p77 = scmp.ne.s32.totalorder %s69, %s71
      %p78 = scmp.eq.s32.totalorder %s19, 1
      %p79 = por %p77, %p78
      %p80 = scmp.ne.s32.totalorder %s71, %s72
      %p81 = scmp.eq.s32.totalorder %s19, 0
      %p82 = por %p80, %p81
      %p83 = scmp.ne.s32.totalorder %s71, %s72
      %p84 = scmp.eq.s32.totalorder %s20, 1
      %p85 = por %p83, %p84
      %p87 = scmp.ne.s32.totalorder %s72, %s86
      %p88 = scmp.eq.s32.totalorder %s20, 0
      %p89 = por %p87, %p88
      %s91 = sadd.s32 %s90, 1
      %p94 = scmp.eq.s32.totalorder %s14, 1
      %p95 = scmp.ne.s32.totalorder %s90, %s92
      %p96 = scmp.eq.s32.totalorder %s14, 0
      %p97 = por %p95, %p96
      %p98 = scmp.ne.s32.totalorder %s90, %s92
      %p99 = scmp.eq.s32.totalorder %s19, 1
      %p100 = por %p98, %p99
      %p101 = scmp.ne.s32.totalorder %s92, %s93
      %p102 = scmp.eq.s32.totalorder %s19, 0
      %p103 = por %p101, %p102
      %p104 = scmp.ne.s32.totalorder %s92, %s93
      %p105 = scmp.eq.s32.totalorder %s20, 1
      %p106 = por %p104, %p105
      %p108 = scmp.ne.s32.totalorder %s93, %s107
      %p109 = scmp.eq.s32.totalorder %s20, 0
      %p110 = por %p108, %p109
      %s111 = ssub.s32 %s14, %s21
      %p112 = scmp.eq.s32.totalorder %s111, 0
      %s114 = sadd.s32 %s113, 1
      %s115 = scalar_select %p112, %s113, %s114
      %p118 = pneg %p112
      %p119 = scmp.eq.s32.totalorder %s14, 1
      %p120 = por %p118, %p119
      %p121 = scmp.ne.s32.totalorder %s113, %s116
      %p122 = scmp.eq.s32.totalorder %s14, 0
      %p123 = por %p121, %p122
      %p124 = scmp.ne.s32.totalorder %s113, %s116
      %p125 = scmp.eq.s32.totalorder %s19, 1
      %p126 = por %p124, %p125
      %p127 = scmp.ne.s32.totalorder %s116, %s117
      %p128 = scmp.eq.s32.totalorder %s19, 0
      %p129 = por %p127, %p128
      %p130 = scmp.ne.s32.totalorder %s116, %s117
      %p131 = scmp.eq.s32.totalorder %s20, 1
      %p132 = por %p130, %p131
      %p134 = scmp.ne.s32.totalorder %s117, %s133
      %p135 = scmp.eq.s32.totalorder %s20, 0
      %p136 = por %p134, %p135
      %p137 = scmp.le.s32.totalorder 1, %s14
      %p138 = scmp.lt.s32.totalorder %s14, 3
      %p139 = pnand %p137, %p138
      %p140 = pneg %p139
      // Predicated region
      $region9: #{tpu_custom_call.1} parent=5 // pred_check
        _
      $region10: #{tpu_custom_call.1} parent=5 // pred_check_branch
        %142 = sbr.rel (%p139) target = $region12
      $region11: #{tpu_custom_call.1} parent=5 // pred_region
        %s143 = ssub.s32 %s14, 1
        // Predicated region
        $region13: #{tpu_custom_call.1} parent=11 // pred_check
          %p144 = pneg %p61
        $region14: #{tpu_custom_call.1} parent=11 // pred_check_branch
          %146 = sbr.rel (%p144) target = $region16
        $region15: #{tpu_custom_call.1} parent=11 // pred_region
          _
        $region16: #{tpu_custom_call.1} parent=11 // pred_fallthru
          _
        // Predicated region
        $region17: #{tpu_custom_call.1} parent=11 // pred_check
          %p147 = pneg %p82
        $region18: #{tpu_custom_call.1} parent=11 // pred_check_branch
          %149 = sbr.rel (%p147) target = $region20
        $region19: #{tpu_custom_call.1} parent=11 // pred_region
          _
        $region20: #{tpu_custom_call.1} parent=11 // pred_fallthru
          _
        // Predicated region
        $region21: #{tpu_custom_call.1} parent=11 // pred_check
          %p150 = pneg %p103
        $region22: #{tpu_custom_call.1} parent=11 // pred_check_branch
          %152 = sbr.rel (%p150) target = $region24
        $region23: #{tpu_custom_call.1} parent=11 // pred_region
          _
        $region24: #{tpu_custom_call.1} parent=11 // pred_fallthru
          _
      $region12: #{tpu_custom_call.1} parent=5 // pred_fallthru
        _
      %p153 = scmp.lt.s32.totalorder %s14, 2
      // Predicated region
      $region25: #{tpu_custom_call.1} parent=5 // pred_check
        %p154 = pneg %p153
      $region26: #{tpu_custom_call.1} parent=5 // pred_check_branch
        %156 = sbr.rel (%p154) target = $region28
      $region27: #{tpu_custom_call.1} parent=5 // pred_region
        // Predicated region
        $region29: #{tpu_custom_call.1} parent=27 // pred_check
          %p157 = pneg %p34
        $region30: #{tpu_custom_call.1} parent=27 // pred_check_branch
          %159 = sbr.rel (%p157) target = $region32
        $region31: #{tpu_custom_call.1} parent=27 // pred_region
          %p160 = scmp.lt.s32.totalorder %s14, 1
          %s161 = scalar_select %p160, %s14, 1
          %s162 = smul.addr %s161, 2
          %s163 = smul.addr %s162, 8
          %s164 = scalar_lea.vmem %s0, %s163
        $region32: #{tpu_custom_call.1} parent=27 // pred_fallthru
          _
      $region28: #{tpu_custom_call.1} parent=5 // pred_fallthru
        _
      %p165 = scmp.le.s32.totalorder 1, %s14
      %p166 = scmp.lt.s32.totalorder %s14, 3
      %p167 = pnand %p165, %p166
      %p168 = pneg %p167
      // Predicated region
      $region33: #{tpu_custom_call.1} parent=5 // pred_check
        _
      $region34: #{tpu_custom_call.1} parent=5 // pred_check_branch
        %170 = sbr.rel (%p167) target = $region36
      $region35: #{tpu_custom_call.1} parent=5 // pred_region
        %s171 = ssub.s32 %s14, 1
        %p172 = scmp.lt.s32.totalorder %s19, 1
        %s173 = scalar_select %p172, %s19, 1
        %s174 = smul.addr %s173, 2
        %s175 = smul.addr %s174, 8
        %s176 = scalar_lea.vmem %s0, %s175
        %p177 = pneg %p40
        %p178 = pneg %p37
        %p179 = pneg %p61
        %p180 = pneg %p58
        %p181 = pneg %p82
        %p182 = pneg %p79
        %p183 = pneg %p103
        %p184 = pneg %p100
        %p185 = pneg %p129
        %p186 = pneg %p126
        %s187 = sand.u32 %s116, 1
        %s188 = scalar_lea.sflag [#allocation5], %s187
        %s189 = sand.u32 %s116, 1
        %s190 = smul.addr %s189, 16
        %s191 = scalar_lea.vmem [#allocation4], %s190
        %p192 = scmp.lt.s32.totalorder %s19, 1
        %s193 = scalar_select %p192, %s19, 1
        %s194 = smul.addr %s193, 2
        %s195 = smul.addr %s194, 8
        %s196 = scalar_lea.vmem %s0, %s195
        %vm197 = vcmask 588800
        %198 = vst.msk [vmem:[#allocation2] sm:$0xff] %vm197, 0.0
        %199 = vst.msk [vmem:[#allocation2 + $0x8] sm:$0xff] %vm197, 0.0
        %vm200 = vcmask 582656
        %201 = vst.msk [vmem:[#allocation2 + $0x10] sm:$0x3] %vm200, 0.0
        %v202 = vld [vmem:[%s196] sm:$0xff]
        %v203 = vld [vmem:[%s196 + $0x8] sm:$0xff]
        %206 = vrot.lane.b32.xlu0 %v202, 4
        %v207 = vpop.permute.xlu0 %206
        %208 = vrot.lane.b32.xlu0 %v203, 4
        %v209 = vpop.permute.xlu0 %208
        %vm212 = vcmask 556064
        %213 = vst.msk [vmem:[#allocation2 + $0x1] sm:$0xff] %vm212, %v207
        %214 = vst.msk [vmem:[#allocation2 + $0x9] sm:$0xff] %vm212, %v209
        %v215 = vld [vmem:[%s2] sm:$0x1]
        %v217 = vlaneseq
        %v218 = vshrl.u32 %v217, 7
        %v219 = vsub.s32 0, %v218
        %v220 = vrot.slane %v215, %v219
        %v222 = vld [vmem:[#allocation2] sm:$0xff]
        %v223 = vld [vmem:[#allocation2 + $0x8] sm:$0xff]
        %v224 = vld [vmem:[%s1] sm:$0xff]
        %v225 = vld [vmem:[%s1 + $0x8] sm:$0xff]
        %v226 = vld [vmem:[%s1 + $0x10] sm:$0xff]
        %v227 = vld [vmem:[%s1 + $0x18] sm:$0xff]
        %v228 = vld [vmem:[%s1 + $0x20] sm:$0xff]
        %v229 = vld [vmem:[%s1 + $0x28] sm:$0xff]
        %v230 = vld [vmem:[%s1 + $0x30] sm:$0xff]
        %v231 = vld [vmem:[%s1 + $0x38] sm:$0xff]
        %v232 = vld [vmem:[%s1 + $0x40] sm:$0xff]
        %v234 = vsel %vm197, %v222, 0
        %v237 = vsel %vm197, %v223, 0
        %239 = vmatprep.subr.mxu0 0.0
        %240 = vmatpush1.msra.mxu0 %v224
        %241 = vmatprep.subr.mxu0 0.0
        %242 = vmatpush1.msra.mxu0 %v225
        %243 = vmatprep.subr.mxu0 0.0
        %244 = vmatpush1.msra.mxu0 %v226
        %245 = vmatprep.subr.mxu0 0.0
        %246 = vmatpush1.msra.mxu0 %v227
        %247 = vmatprep.subr.mxu0 0.0
        %248 = vmatpush1.msra.mxu0 %v228
        %249 = vmatprep.subr.mxu0 0.0
        %250 = vmatpush1.msra.mxu0 %v229
        %251 = vmatprep.subr.mxu0 0.0
        %252 = vmatpush1.msra.mxu0 %v230
        %253 = vmatprep.subr.mxu0 0.0
        %254 = vmatpush1.msra.mxu0 %v231
        %255 = vmatprep.subr.mxu0 0.0
        %256 = vmatpush1.msra.mxu0 %v232
        %257 = vmatprep.subr.mxu0 0.0
        %258 = vmatpush1.msra.mxu0 0.0
        %259 = vmatprep.subr.mxu0 0.0
        %260 = vmatpush1.msra.mxu0 0.0
        %261 = vmatprep.subr.mxu0 0.0
        %262 = vmatpush1.msra.mxu0 0.0
        %263 = vmatprep.subr.mxu0 0.0
        %264 = vmatpush1.msra.mxu0 0.0
        %265 = vmatprep.subr.mxu0 0.0
        %266 = vmatpush1.msra.mxu0 0.0
        %267 = vmatprep.subr.mxu0 0.0
        %268 = vmatpush1.msra.mxu0 0.0
        %269 = vmatprep.subr.mxu0 0.0
        %270 = vmatpush1.msra.mxu0 0.0
        %271 = vmatprep.subr.mxu0 0.0
        %272 = vmatpush1.msra.mxu0 0.0
        %273 = vmatprep.subr.mxu0 0.0
        %274 = vmatpush1.msra.mxu0 0.0
        %275 = vmatprep.subr.mxu0 0.0
        %276 = vmatpush1.msra.mxu0 0.0
        %277 = vmatprep.subr.mxu0 0.0
        %278 = vmatpush1.msra.mxu0 0.0
        %279 = vmatprep.subr.mxu0 0.0
        %280 = vmatpush1.msra.mxu0 0.0
        %281 = vmatprep.subr.mxu0 0.0
        %282 = vmatpush1.msra.mxu0 0.0
        %283 = vmatprep.subr.mxu0 0.0
        %284 = vmatpush1.msra.mxu0 0.0
        %285 = vmatprep.subr.mxu0 0.0
        %286 = vmatpush1.msra.mxu0 0.0
        %287 = vmatprep.subr.mxu0 0.0
        %288 = vmatpush1.msra.mxu0 0.0
        %289 = vmatprep.subr.mxu0 0.0
        %290 = vmatpush1.msra.mxu0 0.0
        %291 = vmatprep.subr.mxu0 0.0
        %292 = vmatpush1.msra.mxu0 0.0
        %293 = vmatprep.subr.mxu0 0.0
        %294 = vmatpush1.msra.mxu0 0.0
        %295 = vmatprep.subr.mxu0 0.0
        %296 = vmatpush1.msra.mxu0 0.0
        %297 = vmatprep.subr.mxu0 0.0
        %298 = vmatpush1.msra.mxu0 0.0
        %299 = vmatprep.subr.mxu0 0.0
        %300 = vmatpush1.msra.mxu0 0.0
        %301 = vmatprep.subr.mxu0 0.0
        %302 = vmatpush1.msra.mxu0 0.0
        %303 = vmatprep.mubr.f32.mxu0 0.0
        %304 = vmatmul.mubr.f32.gmra.mrb[0].mxu0 %v234
        %v305 = vpop.f32.mrb[0].mxu0
        %v306 = vadd.f32 0.0, %v305
        %v307 = vpop.f32.mrb[0].mxu0
        %308 = vmatprep.mubr.f32.mxu0 0.0
        %309 = vmatmul.mubr.f32.gmra.mrb[0].mxu0 %v237
        %v310 = vpop.f32.mrb[0].mxu0
        %v311 = vadd.f32 0.0, %v310
        %v312 = vpop.f32.mrb[0].mxu0
        %313 = vdwg.mxu0
        %v314 = vadd.f32 %v220, %v306
        %v315 = vadd.f32 %v220, %v311
        %v316 = vld [vmem:[#allocation2 + $0x1] sm:$0xff]
        %v317 = vld [vmem:[#allocation2 + $0x9] sm:$0xff]
        %s318 = scalar_lea.vmem %s1, 72
        %v319 = vld [vmem:[%s318] sm:$0xff]
        %v320 = vld [vmem:[%s318 + $0x8] sm:$0xff]
        %v321 = vld [vmem:[%s318 + $0x10] sm:$0xff]
        %v322 = vld [vmem:[%s318 + $0x18] sm:$0xff]
        %v323 = vld [vmem:[%s318 + $0x20] sm:$0xff]
        %v324 = vld [vmem:[%s318 + $0x28] sm:$0xff]
        %v325 = vld [vmem:[%s318 + $0x30] sm:$0xff]
        %v326 = vld [vmem:[%s318 + $0x38] sm:$0xff]
        %v327 = vld [vmem:[%s318 + $0x40] sm:$0xff]
        %v329 = vsel %vm197, %v316, 0
        %v332 = vsel %vm197, %v317, 0
        %334 = vmatprep.subr.mxu0 0.0
        %335 = vmatpush1.msra.mxu0 %v319
        %336 = vmatprep.subr.mxu0 0.0
        %337 = vmatpush1.msra.mxu0 %v320
        %338 = vmatprep.subr.mxu0 0.0
        %339 = vmatpush1.msra.mxu0 %v321
        %340 = vmatprep.subr.mxu0 0.0
        %341 = vmatpush1.msra.mxu0 %v322
        %342 = vmatprep.subr.mxu0 0.0
        %343 = vmatpush1.msra.mxu0 %v323
        %344 = vmatprep.subr.mxu0 0.0
        %345 = vmatpush1.msra.mxu0 %v324
        %346 = vmatprep.subr.mxu0 0.0
        %347 = vmatpush1.msra.mxu0 %v325
        %348 = vmatprep.subr.mxu0 0.0
        %349 = vmatpush1.msra.mxu0 %v326
        %350 = vmatprep.subr.mxu0 0.0
        %351 = vmatpush1.msra.mxu0 %v327
        %352 = vmatprep.subr.mxu0 0.0
        %353 = vmatpush1.msra.mxu0 0.0
        %354 = vmatprep.subr.mxu0 0.0
        %355 = vmatpush1.msra.mxu0 0.0
        %356 = vmatprep.subr.mxu0 0.0
        %357 = vmatpush1.msra.mxu0 0.0
        %358 = vmatprep.subr.mxu0 0.0
        %359 = vmatpush1.msra.mxu0 0.0
        %360 = vmatprep.subr.mxu0 0.0
        %361 = vmatpush1.msra.mxu0 0.0
        %362 = vmatprep.subr.mxu0 0.0
        %363 = vmatpush1.msra.mxu0 0.0
        %364 = vmatprep.subr.mxu0 0.0
        %365 = vmatpush1.msra.mxu0 0.0
        %366 = vmatprep.subr.mxu0 0.0
        %367 = vmatpush1.msra.mxu0 0.0
        %368 = vmatprep.subr.mxu0 0.0
        %369 = vmatpush1.msra.mxu0 0.0
        %370 = vmatprep.subr.mxu0 0.0
        %371 = vmatpush1.msra.mxu0 0.0
        %372 = vmatprep.subr.mxu0 0.0
        %373 = vmatpush1.msra.mxu0 0.0
        %374 = vmatprep.subr.mxu0 0.0
        %375 = vmatpush1.msra.mxu0 0.0
        %376 = vmatprep.subr.mxu0 0.0
        %377 = vmatpush1.msra.mxu0 0.0
        %378 = vmatprep.subr.mxu0 0.0
        %379 = vmatpush1.msra.mxu0 0.0
        %380 = vmatprep.subr.mxu0 0.0
        %381 = vmatpush1.msra.mxu0 0.0
        %382 = vmatprep.subr.mxu0 0.0
        %383 = vmatpush1.msra.mxu0 0.0
        %384 = vmatprep.subr.mxu0 0.0
        %385 = vmatpush1.msra.mxu0 0.0
        %386 = vmatprep.subr.mxu0 0.0
        %387 = vmatpush1.msra.mxu0 0.0
        %388 = vmatprep.subr.mxu0 0.0
        %389 = vmatpush1.msra.mxu0 0.0
        %390 = vmatprep.subr.mxu0 0.0
        %391 = vmatpush1.msra.mxu0 0.0
        %392 = vmatprep.subr.mxu0 0.0
        %393 = vmatpush1.msra.mxu0 0.0
        %394 = vmatprep.subr.mxu0 0.0
        %395 = vmatpush1.msra.mxu0 0.0
        %396 = vmatprep.subr.mxu0 0.0
        %397 = vmatpush1.msra.mxu0 0.0
        %398 = vmatprep.mubr.f32.mxu0 0.0
        %399 = vmatmul.mubr.f32.gmra.mrb[0].mxu0 %v329
        %v400 = vpop.f32.mrb[0].mxu0
        %v401 = vadd.f32 0.0, %v400
        %v402 = vpop.f32.mrb[0].mxu0
        %403 = vmatprep.mubr.f32.mxu0 0.0
        %404 = vmatmul.mubr.f32.gmra.mrb[0].mxu0 %v332
        %v405 = vpop.f32.mrb[0].mxu0
        %v406 = vadd.f32 0.0, %v405
        %v407 = vpop.f32.mrb[0].mxu0
        %408 = vdwg.mxu0
        %v409 = vadd.f32 %v314, %v401
        %v410 = vadd.f32 %v315, %v406
        %v411 = vld [vmem:[#allocation2 + $0x2] sm:$0xff]
        %v412 = vld [vmem:[#allocation2 + $0xa] sm:$0xff]
        %s413 = scalar_lea.vmem %s1, 144
        %v414 = vld [vmem:[%s413] sm:$0xff]
        %v415 = vld [vmem:[%s413 + $0x8] sm:$0xff]
        %v416 = vld [vmem:[%s413 + $0x10] sm:$0xff]
        %v417 = vld [vmem:[%s413 + $0x18] sm:$0xff]
        %v418 = vld [vmem:[%s413 + $0x20] sm:$0xff]
        %v419 = vld [vmem:[%s413 + $0x28] sm:$0xff]
        %v420 = vld [vmem:[%s413 + $0x30] sm:$0xff]
        %v421 = vld [vmem:[%s413 + $0x38] sm:$0xff]
        %v422 = vld [vmem:[%s413 + $0x40] sm:$0xff]
        %v424 = vsel %vm197, %v411, 0
        %v427 = vsel %vm197, %v412, 0
        %429 = vmatprep.subr.mxu0 0.0
        %430 = vmatpush1.msra.mxu0 %v414
        %431 = vmatprep.subr.mxu0 0.0
        %432 = vmatpush1.msra.mxu0 %v415
        %433 = vmatprep.subr.mxu0 0.0
        %434 = vmatpush1.msra.mxu0 %v416
        %435 = vmatprep.subr.mxu0 0.0
        %436 = vmatpush1.msra.mxu0 %v417
        %437 = vmatprep.subr.mxu0 0.0
        %438 = vmatpush1.msra.mxu0 %v418
        %439 = vmatprep.subr.mxu0 0.0
        %440 = vmatpush1.msra.mxu0 %v419
        %441 = vmatprep.subr.mxu0 0.0
        %442 = vmatpush1.msra.mxu0 %v420
        %443 = vmatprep.subr.mxu0 0.0
        %444 = vmatpush1.msra.mxu0 %v421
        %445 = vmatprep.subr.mxu0 0.0
        %446 = vmatpush1.msra.mxu0 %v422
        %447 = vmatprep.subr.mxu0 0.0
        %448 = vmatpush1.msra.mxu0 0.0
        %449 = vmatprep.subr.mxu0 0.0
        %450 = vmatpush1.msra.mxu0 0.0
        %451 = vmatprep.subr.mxu0 0.0
        %452 = vmatpush1.msra.mxu0 0.0
        %453 = vmatprep.subr.mxu0 0.0
        %454 = vmatpush1.msra.mxu0 0.0
        %455 = vmatprep.subr.mxu0 0.0
        %456 = vmatpush1.msra.mxu0 0.0
        %457 = vmatprep.subr.mxu0 0.0
        %458 = vmatpush1.msra.mxu0 0.0
        %459 = vmatprep.subr.mxu0 0.0
        %460 = vmatpush1.msra.mxu0 0.0
        %461 = vmatprep.subr.mxu0 0.0
        %462 = vmatpush1.msra.mxu0 0.0
        %463 = vmatprep.subr.mxu0 0.0
        %464 = vmatpush1.msra.mxu0 0.0
        %465 = vmatprep.subr.mxu0 0.0
        %466 = vmatpush1.msra.mxu0 0.0
        %467 = vmatprep.subr.mxu0 0.0
        %468 = vmatpush1.msra.mxu0 0.0
        %469 = vmatprep.subr.mxu0 0.0
        %470 = vmatpush1.msra.mxu0 0.0
        %471 = vmatprep.subr.mxu0 0.0
        %472 = vmatpush1.msra.mxu0 0.0
        %473 = vmatprep.subr.mxu0 0.0
        %474 = vmatpush1.msra.mxu0 0.0
        %475 = vmatprep.subr.mxu0 0.0
        %476 = vmatpush1.msra.mxu0 0.0
        %477 = vmatprep.subr.mxu0 0.0
        %478 = vmatpush1.msra.mxu0 0.0
        %479 = vmatprep.subr.mxu0 0.0
        %480 = vmatpush1.msra.mxu0 0.0
        %481 = vmatprep.subr.mxu0 0.0
        %482 = vmatpush1.msra.mxu0 0.0
        %483 = vmatprep.subr.mxu0 0.0
        %484 = vmatpush1.msra.mxu0 0.0
        %485 = vmatprep.subr.mxu0 0.0
        %486 = vmatpush1.msra.mxu0 0.0
        %487 = vmatprep.subr.mxu0 0.0
        %488 = vmatpush1.msra.mxu0 0.0
        %489 = vmatprep.subr.mxu0 0.0
        %490 = vmatpush1.msra.mxu0 0.0
        %491 = vmatprep.subr.mxu0 0.0
        %492 = vmatpush1.msra.mxu0 0.0
        %493 = vmatprep.mubr.f32.mxu0 0.0
        %494 = vmatmul.mubr.f32.gmra.mrb[0].mxu0 %v424
        %v495 = vpop.f32.mrb[0].mxu0
        %v496 = vadd.f32 0.0, %v495
        %v497 = vpop.f32.mrb[0].mxu0
        %498 = vmatprep.mubr.f32.mxu0 0.0
        %499 = vmatmul.mubr.f32.gmra.mrb[0].mxu0 %v427
        %v500 = vpop.f32.mrb[0].mxu0
        %v501 = vadd.f32 0.0, %v500
        %v502 = vpop.f32.mrb[0].mxu0
        %503 = vdwg.mxu0
        %v504 = vadd.f32 %v409, %v496
        %v505 = vadd.f32 %v410, %v501
        %v506 = vmax.f32 %v504, 0.0
        %v507 = vmax.f32 %v505, 0.0
        %s508 = sld [smem:[#allocation3]]
        %v509 = vstv %s508
        %v510 = vmul.f32 %v509, %v506
        %v511 = vmul.f32 %v509, %v507
        %v512 = vadd.f32 %v202, %v510
        %v513 = vadd.f32 %v203, %v511
        %vm514 = vcmask 523264
        %515 = vst.msk [vmem:[%s191] sm:$0xff] %vm514, %v512
        %516 = vst.msk [vmem:[%s191 + $0x8] sm:$0xff] %vm514, %v513
        %s517 = sand.u32 %s116, 1
        %s518 = scalar_lea.sflag [#allocation5], %s517
        %s519 = sand.u32 %s116, 1
        %s520 = smul.addr %s519, 16
        %s521 = scalar_lea.vmem [#allocation4], %s520
        // Predicated region
        $region37: #{tpu_custom_call.1} parent=35 // pred_check
          %p522 = pneg %p126
        $region38: #{tpu_custom_call.1} parent=35 // pred_check_branch
          %524 = sbr.rel (%p522) target = $region40
        $region39: #{tpu_custom_call.1} parent=35 // pred_region
          %s526 = ssub.s32 256, 256
          %527 = vsyncadd %s518, %s526
          %s528 = smul.addr %s19, 2
          %s529 = smul.addr %s528, 128
          %s530 = scalar_lea.hbm %s4, %s529
          %s531 = sshll.u32 %s521, 4
          %s532 = int_to_ptr.vmem [resolvable:$true] %s531
          %537 = dma.vmem_to_hbm [thread:$0]  %s532, 256, %s530, %s518, 128, 128, 8
        $region40: #{tpu_custom_call.1} parent=35 // pred_fallthru
          _
      $region36: #{tpu_custom_call.1} parent=5 // pred_fallthru
        _
      %p538 = scmp.le.s32.totalorder 2, %s14
      // Predicated region
      $region41: #{tpu_custom_call.1} parent=5 // pred_check
        %p539 = pneg %p538
      $region42: #{tpu_custom_call.1} parent=5 // pred_check_branch
        %541 = sbr.rel (%p539) target = $region44
      $region43: #{tpu_custom_call.1} parent=5 // pred_region
        %s542 = ssub.s32 %s14, 2
        // Predicated region
        $region45: #{tpu_custom_call.1} parent=43 // pred_check
          %p543 = pneg %p132
        $region46: #{tpu_custom_call.1} parent=43 // pred_check_branch
          %545 = sbr.rel (%p543) target = $region48
        $region47: #{tpu_custom_call.1} parent=43 // pred_region
          %s546 = sand.u32 %s117, 1
          %s547 = scalar_lea.sflag [#allocation5], %s546
          %s548 = sand.u32 %s117, 1
          %s549 = smul.addr %s548, 16
          %s550 = scalar_lea.vmem [#allocation4], %s549
          %551 = dma.done %s547, 256
        $region48: #{tpu_custom_call.1} parent=43 // pred_fallthru
          _
      $region44: #{tpu_custom_call.1} parent=5 // pred_fallthru
        _
    $region6: #{tpu_custom_call.1} parent=1 // loop_footer
      %s18 = sadd.s32 1, %s14
    $region7: #{tpu_custom_call.1} parent=1 // loop_footer_branch
      %13 = sbr.rel target = $region3
    $region8: #{tpu_custom_call.1} parent=1 // loop_exit
      _
    %552 = vsyncpa [#allocation5], 1
    %s553 = scalar_lea.sflag [#allocation5], 1
    %554 = vsyncpa %s553, 1

</llo_original>
